<compile_context>
chip_gen: v7x
topology: tpu7x:2x2x1
jax: 0.10.0
libtpu: 0.0.40
codegen_flags: <defaults>
</compile_context>

<pallas_src>
from functools import partial

import jax
import jax.numpy as jnp
from jax.experimental import pallas as pl
from jax.experimental.pallas import tpu as pltpu

IN_F = 3
HID_F = 16
OUT_F = 2


def _round_up(x, m):
    return ((x + m - 1) // m) * m


def mlp_kernel(xt_ref, w1_ref, b1_ref, w2t_ref, b2_ref, ot_ref):
    xt = xt_ref[...]          # (3,  TILE_B)  f32, batch on lanes
    w1 = w1_ref[...]          # (16, 3)  == 2 * fc1.weight  (x+x folded in)
    b1 = b1_ref[...]          # (16, 1)  == 2 * fc1.bias
    w2t = w2t_ref[...]        # (16, 2)  == fc2.weight.T
    b2 = b2_ref[...]          # (2,  1)

    # fc1 (with the x2 already folded into w1/b1): 3 lane-dense VPU
    # broadcast-FMAs -> (16, TILE_B).
    h = (w1[:, 0:1] * xt[0:1, :]
         + w1[:, 1:2] * xt[1:2, :]
         + w1[:, 2:3] * xt[2:3, :]
         + b1)
    # relu(2*z) == relu(z + z), so this matches the original module exactly.
    h = jnp.maximum(h, 0.0)

    # fc2: per output row, a full-width (16, TILE_B) multiply then a sublane
    # reduction (goes to the otherwise-idle XLU slot), instead of 16 unrolled
    # mul+add pairs on 25%-sublane-utilized (2, TILE_B) vregs.
    r0 = jnp.sum(w2t[:, 0:1] * h, axis=0, keepdims=True)   # (1, TILE_B)
    r1 = jnp.sum(w2t[:, 1:2] * h, axis=0, keepdims=True)   # (1, TILE_B)

    ot_ref[0:1, :] = (r0 + b2[0:1, :]).astype(ot_ref.dtype)
    ot_ref[1:2, :] = (r1 + b2[1:2, :]).astype(ot_ref.dtype)


def _pick_tile(B, tile_b):
    Bp128 = _round_up(max(B, 1), 128)
    tb = min(tile_b, Bp128)
    # Keep >= 2 "parallel" grid steps when the batch allows it, so the grid
    # axis can shard across both TensorCores on v7x.
    if Bp128 >= 2 * 128 and Bp128 // tb < 2:
        tb = _round_up(-(-Bp128 // 2), 128)
    Bp = _round_up(max(B, 1), tb)
    return tb, Bp


@partial(jax.jit, static_argnames=("tile_b",))
def mlp_forward(x, w1, b1, w2, b2, *, tile_b=32768):
    """x: (B, 3) row-major (torch layout). Returns (B, 2)."""
    B = x.shape[0]
    tb, Bp = _pick_tile(B, tile_b)

    # Fold the "x + x" doubling into fc1's tiny weights; put weights in the
    # layouts the kernel wants (all of this is a few-hundred-byte op).
    w1f = (2.0 * w1).astype(jnp.float32)                       # (16, 3)
    b1f = (2.0 * b1).reshape(HID_F, 1).astype(jnp.float32)     # (16, 1)
    w2t = w2.T.astype(jnp.float32)                             # (16, 2)
    b2c = b2.reshape(OUT_F, 1).astype(jnp.float32)             # (2, 1)

    # Feature-major, batch-padded input.  Under jit the transpose + pad fuse
    # into a single copy pass (no zero-materialize + scatter).
    xt = jnp.pad(x.astype(jnp.float32).T, ((0, 0), (0, Bp - B)))

    grid = (Bp // tb,)

    out_t = pl.pallas_call(
        mlp_kernel,
        out_shape=jax.ShapeDtypeStruct((OUT_F, Bp), jnp.float32),
        grid_spec=pltpu.PrefetchScalarGridSpec(
            num_scalar_prefetch=0,
            grid=grid,
            in_specs=[
                pl.BlockSpec((IN_F, tb), lambda i: (0, i)),      # x^T tile
                pl.BlockSpec((HID_F, IN_F), lambda i: (0, 0)),   # 2*w1 (16,3)
                pl.BlockSpec((HID_F, 1), lambda i: (0, 0)),      # 2*b1 (16,1)
                pl.BlockSpec((HID_F, OUT_F), lambda i: (0, 0)),  # w2^T (16,2)
                pl.BlockSpec((OUT_F, 1), lambda i: (0, 0)),      # b2   (2,1)
            ],
            out_specs=pl.BlockSpec((OUT_F, tb), lambda i: (0, i)),
        ),
        compiler_params=pltpu.CompilerParams(
            dimension_semantics=("parallel",),
        ),
        cost_estimate=pl.CostEstimate(
            flops=int((2 * HID_F * IN_F + HID_F + 2 * OUT_F * HID_F + OUT_F) * Bp),
            transcendentals=0,
            bytes_accessed=int(4 * (IN_F + OUT_F) * Bp
                               + 4 * (HID_F * IN_F + HID_F
                                      + OUT_F * HID_F + OUT_F)),
        ),
    )(xt, w1f, b1f, w2t, b2c)

    # Slice off batch padding and return row-major (B, 2).
    # TODO(synk): a feature-major (3,B)/(2,B) caller contract would remove
    # this final transpose entirely for bandwidth-critical large-B use.
    return out_t[:, :B].T


def init_params(key):
    # torch nn.Linear layouts: fc1.weight (16,3), fc1.bias (16,);
    #                          fc2.weight (2,16), fc2.bias (2,).
    k1, k2, k3, k4 = jax.random.split(key, 4)
    w1 = jax.random.normal(k1, (HID_F, IN_F), jnp.float32) * 0.1
    b1 = jax.random.normal(k2, (HID_F,), jnp.float32) * 0.1
    w2 = jax.random.normal(k3, (OUT_F, HID_F), jnp.float32) * 0.1
    b2 = jax.random.normal(k4, (OUT_F,), jnp.float32) * 0.1
    return w1, b1, w2, b2


def reference_forward(x, w1, b1, w2, b2):
    h = x @ w1.T + b1.reshape(1, -1)
    h = h + h
    h = jnp.maximum(h, 0.0)
    return h @ w2.T + b2.reshape(1, -1)


if __name__ == "__main__":
    key = jax.random.PRNGKey(0)
    kx, kp, kx2 = jax.random.split(key, 3)
    w1, b1, w2, b2 = init_params(kp)

    # Small batch consistent with the module (inputs: (batch, 3)).
    x = jax.random.normal(kx, (2, IN_F), jnp.float32)
    out = jax.block_until_ready(mlp_forward(x, w1, b1, w2, b2))
    ref = reference_forward(x, w1, b1, w2, b2)
    assert out.shape == (2, OUT_F)
    assert jnp.allclose(out, ref, atol=1e-5, rtol=1e-5)

    # A non-multiple-of-128 batch exercises padding and the multi-step
    # (>=2 "parallel" steps) grid path.
    x2 = jax.random.normal(kx2, (300, IN_F), jnp.float32)
    out2 = jax.block_until_ready(mlp_forward(x2, w1, b1, w2, b2))
    ref2 = reference_forward(x2, w1, b1, w2, b2)
    assert out2.shape == (300, OUT_F)
    assert jnp.allclose(out2, ref2, atol=1e-5, rtol=1e-5)

    print("KERNEL_OK")
</pallas_src>

<mosaic_0001>
module attributes {stable_mosaic.version = 11 : i64} {
  func.func @mlp_kernel(%arg0: i32, %arg1: memref<3x128xf32, #tpu.memory_space<vmem>>, %arg2: memref<16x3xf32, #tpu.memory_space<vmem>>, %arg3: memref<16x1xf32, #tpu.memory_space<vmem>>, %arg4: memref<16x2xf32, #tpu.memory_space<vmem>>, %arg5: memref<2x1xf32, #tpu.memory_space<vmem>>, %arg6: memref<2x128xf32, #tpu.memory_space<vmem>>) attributes {dimension_semantics = [#tpu.dimension_semantics<parallel>], iteration_bounds = array<i64: 1>, scalar_prefetch = 0 : i64, scratch_operands = 0 : i64, tpu.core_type = #tpu.core_type<tc>, window_params = [{transform_indices = @transform_0, window_bounds = array<i64: 3, 128>}, {pipeline_mode = #tpu.pipeline_mode<synchronous>, transform_indices = @transform_1, window_bounds = array<i64: 16, 3>}, {pipeline_mode = #tpu.pipeline_mode<synchronous>, transform_indices = @transform_2, window_bounds = array<i64: 16, 1>}, {pipeline_mode = #tpu.pipeline_mode<synchronous>, transform_indices = @transform_3, window_bounds = array<i64: 16, 2>}, {pipeline_mode = #tpu.pipeline_mode<synchronous>, transform_indices = @transform_4, window_bounds = array<i64: 2, 1>}, {transform_indices = @transform_5, window_bounds = array<i64: 2, 128>}]} {
    %c0 = arith.constant 0 : index
    %c0_0 = arith.constant 0 : index
    %0 = vector.load %arg1[%c0, %c0_0] : memref<3x128xf32, #tpu.memory_space<vmem>>, vector<3x128xf32>
    %c0_1 = arith.constant 0 : index
    %c0_2 = arith.constant 0 : index
    %1 = vector.load %arg2[%c0_1, %c0_2] : memref<16x3xf32, #tpu.memory_space<vmem>>, vector<16x3xf32>
    %c0_3 = arith.constant 0 : index
    %c0_4 = arith.constant 0 : index
    %2 = vector.load %arg3[%c0_3, %c0_4] : memref<16x1xf32, #tpu.memory_space<vmem>>, vector<16x1xf32>
    %c0_5 = arith.constant 0 : index
    %c0_6 = arith.constant 0 : index
    %3 = vector.load %arg4[%c0_5, %c0_6] : memref<16x2xf32, #tpu.memory_space<vmem>>, vector<16x2xf32>
    %c0_7 = arith.constant 0 : index
    %c0_8 = arith.constant 0 : index
    %4 = vector.load %arg5[%c0_7, %c0_8] : memref<2x1xf32, #tpu.memory_space<vmem>>, vector<2x1xf32>
    %5 = vector.extract_strided_slice %1 {offsets = [0, 0], sizes = [16, 1], strides = [1, 1]} : vector<16x3xf32> to vector<16x1xf32>
    %6 = vector.extract_strided_slice %0 {offsets = [0, 0], sizes = [1, 128], strides = [1, 1]} : vector<3x128xf32> to vector<1x128xf32>
    %7 = vector.broadcast %5 : vector<16x1xf32> to vector<16x128xf32>
    %8 = vector.broadcast %6 : vector<1x128xf32> to vector<16x128xf32>
    %9 = arith.mulf %7, %8 : vector<16x128xf32>
    %10 = vector.extract_strided_slice %1 {offsets = [0, 1], sizes = [16, 1], strides = [1, 1]} : vector<16x3xf32> to vector<16x1xf32>
    %11 = vector.extract_strided_slice %0 {offsets = [1, 0], sizes = [1, 128], strides = [1, 1]} : vector<3x128xf32> to vector<1x128xf32>
    %12 = vector.broadcast %10 : vector<16x1xf32> to vector<16x128xf32>
    %13 = vector.broadcast %11 : vector<1x128xf32> to vector<16x128xf32>
    %14 = arith.mulf %12, %13 : vector<16x128xf32>
    %15 = arith.addf %9, %14 : vector<16x128xf32>
    %16 = vector.extract_strided_slice %1 {offsets = [0, 2], sizes = [16, 1], strides = [1, 1]} : vector<16x3xf32> to vector<16x1xf32>
    %17 = vector.extract_strided_slice %0 {offsets = [2, 0], sizes = [1, 128], strides = [1, 1]} : vector<3x128xf32> to vector<1x128xf32>
    %18 = vector.broadcast %16 : vector<16x1xf32> to vector<16x128xf32>
    %19 = vector.broadcast %17 : vector<1x128xf32> to vector<16x128xf32>
    %20 = arith.mulf %18, %19 : vector<16x128xf32>
    %21 = arith.addf %15, %20 : vector<16x128xf32>
    %22 = vector.broadcast %2 : vector<16x1xf32> to vector<16x128xf32>
    %23 = arith.addf %21, %22 : vector<16x128xf32>
    %cst = arith.constant 0.000000e+00 : f32
    %24 = vector.broadcast %cst : f32 to vector<16x128xf32>
    %25 = arith.maximumf %23, %24 : vector<16x128xf32>
    %26 = vector.extract_strided_slice %3 {offsets = [0, 0], sizes = [16, 1], strides = [1, 1]} : vector<16x2xf32> to vector<16x1xf32>
    %27 = vector.broadcast %26 : vector<16x1xf32> to vector<16x128xf32>
    %28 = arith.mulf %27, %25 : vector<16x128xf32>
    %cst_9 = arith.constant dense<0.000000e+00> : vector<128xf32>
    %29 = vector.multi_reduction <add>, %28, %cst_9 [0] : vector<16x128xf32> to vector<128xf32>
    %30 = vector.shape_cast %29 : vector<128xf32> to vector<1x128xf32>
    %31 = vector.extract_strided_slice %3 {offsets = [0, 1], sizes = [16, 1], strides = [1, 1]} : vector<16x2xf32> to vector<16x1xf32>
    %32 = vector.broadcast %31 : vector<16x1xf32> to vector<16x128xf32>
    %33 = arith.mulf %32, %25 : vector<16x128xf32>
    %cst_10 = arith.constant dense<0.000000e+00> : vector<128xf32>
    %34 = vector.multi_reduction <add>, %33, %cst_10 [0] : vector<16x128xf32> to vector<128xf32>
    %35 = vector.shape_cast %34 : vector<128xf32> to vector<1x128xf32>
    %36 = vector.extract_strided_slice %4 {offsets = [0, 0], sizes = [1, 1], strides = [1, 1]} : vector<2x1xf32> to vector<1x1xf32>
    %37 = vector.broadcast %36 : vector<1x1xf32> to vector<1x128xf32>
    %38 = arith.addf %30, %37 : vector<1x128xf32>
    %c0_11 = arith.constant 0 : index
    %c0_12 = arith.constant 0 : index
    %39 = vector.load %arg6[%c0_11, %c0_12] : memref<2x128xf32, #tpu.memory_space<vmem>>, vector<1x128xf32>
    tpu.vector_store %arg6[%c0_11, %c0_12], %38 {strides = array<i32>} : memref<2x128xf32, #tpu.memory_space<vmem>>, vector<1x128xf32>,
    %40 = vector.extract_strided_slice %4 {offsets = [1, 0], sizes = [1, 1], strides = [1, 1]} : vector<2x1xf32> to vector<1x1xf32>
    %41 = vector.broadcast %40 : vector<1x1xf32> to vector<1x128xf32>
    %42 = arith.addf %35, %41 : vector<1x128xf32>
    %c1 = arith.constant 1 : index
    %c0_13 = arith.constant 0 : index
    %43 = vector.load %arg6[%c1, %c0_13] : memref<2x128xf32, #tpu.memory_space<vmem>>, vector<1x128xf32>
    tpu.vector_store %arg6[%c1, %c0_13], %42 {strides = array<i32>} : memref<2x128xf32, #tpu.memory_space<vmem>>, vector<1x128xf32>,
    return
  }
  func.func @transform_0(%arg0: i32) -> (i32, i32) {
    %c0_i32 = arith.constant 0 : i32
    %c0_i32_0 = arith.constant 0 : i32
    return %c0_i32, %arg0 : i32, i32
  }
  func.func @transform_1(%arg0: i32) -> (i32, i32) {
    %c0_i32 = arith.constant 0 : i32
    %c0_i32_0 = arith.constant 0 : i32
    %c0_i32_1 = arith.constant 0 : i32
    return %c0_i32, %c0_i32_0 : i32, i32
  }
  func.func @transform_2(%arg0: i32) -> (i32, i32) {
    %c0_i32 = arith.constant 0 : i32
    %c0_i32_0 = arith.constant 0 : i32
    %c0_i32_1 = arith.constant 0 : i32
    return %c0_i32, %c0_i32_0 : i32, i32
  }
  func.func @transform_3(%arg0: i32) -> (i32, i32) {
    %c0_i32 = arith.constant 0 : i32
    %c0_i32_0 = arith.constant 0 : i32
    %c0_i32_1 = arith.constant 0 : i32
    return %c0_i32, %c0_i32_0 : i32, i32
  }
  func.func @transform_4(%arg0: i32) -> (i32, i32) {
    %c0_i32 = arith.constant 0 : i32
    %c0_i32_0 = arith.constant 0 : i32
    %c0_i32_1 = arith.constant 0 : i32
    return %c0_i32, %c0_i32_0 : i32, i32
  }
  func.func @transform_5(%arg0: i32) -> (i32, i32) {
    %c0_i32 = arith.constant 0 : i32
    %c0_i32_0 = arith.constant 0 : i32
    return %c0_i32, %arg0 : i32, i32
  }
}

</mosaic_0001>

<llo_original>
// kernel: mlp_forward.1
$region0: #{mlp_forward.1}
  #allocation0 [shape = 'u32[]', space=smem, size = 0x4, offset = 0x4, fixed_abs, tag = 'smem constant byte address 0x4 - core index']
  #allocation1 [shape = 'u32[144,128]{1,0:T(1,128)}', space=vmem, size = 0x12000, scoped, tag = 'internal scratch']
  %s0 = inlined_call_operand.vmem [shape: f32[3,128], index: 0, kind: input, shape index: {}]
  %s1 = inlined_call_operand.vmem [shape: f32[16,3], index: 1, kind: input, shape index: {}]
  %s2 = inlined_call_operand.vmem [shape: f32[16,1], index: 2, kind: input, shape index: {}]
  %s3 = inlined_call_operand.vmem [shape: f32[16,2], index: 3, kind: input, shape index: {}]
  %s4 = inlined_call_operand.vmem [shape: f32[2,1], index: 4, kind: input, shape index: {}]
  %s5 = inlined_call_operand.vmem [shape: f32[2,128], index: 5, kind: output, shape index: {}]
  %s6 = sld [smem:[#allocation0]]
  $region30: #{mlp_forward.1} parent=0
    _
  %s8 = ssub.s32 1, %s6
  %s9 = scalar_select 0, %s8, %s6
  // Predicated region
  $region2: #{mlp_forward.1} parent=0 // pred_check
    _
  $region3: #{mlp_forward.1} parent=0 // pred_check_branch
    %11 = sbr.rel (0) target = $region5
  $region4: #{mlp_forward.1} parent=0 // pred_region
    _
  $region5: #{mlp_forward.1} parent=0 // pred_fallthru
    _
  // Predicated region
  $region6: #{mlp_forward.1} parent=0 // pred_check
    _
  $region7: #{mlp_forward.1} parent=0 // pred_check_branch
    %13 = sbr.rel (0) target = $region9
  $region8: #{mlp_forward.1} parent=0 // pred_region
    _
  $region9: #{mlp_forward.1} parent=0 // pred_fallthru
    _
  // Predicated region
  $region10: #{mlp_forward.1} parent=0 // pred_check
    _
  $region11: #{mlp_forward.1} parent=0 // pred_check_branch
    %15 = sbr.rel (0) target = $region13
  $region12: #{mlp_forward.1} parent=0 // pred_region
    _
  $region13: #{mlp_forward.1} parent=0 // pred_fallthru
    _
  // Predicated region
  $region14: #{mlp_forward.1} parent=0 // pred_check
    _
  $region15: #{mlp_forward.1} parent=0 // pred_check_branch
    %17 = sbr.rel (0) target = $region17
  $region16: #{mlp_forward.1} parent=0 // pred_region
    _
  $region17: #{mlp_forward.1} parent=0 // pred_fallthru
    _
  // Predicated region
  $region18: #{mlp_forward.1} parent=0 // pred_check
    _
  $region19: #{mlp_forward.1} parent=0 // pred_check_branch
    %19 = sbr.rel (0) target = $region21
  $region20: #{mlp_forward.1} parent=0 // pred_region
    _
  $region21: #{mlp_forward.1} parent=0 // pred_fallthru
    _
  %v20 = vld [vmem:[%s0] sm:$0x7]
  %v21 = vld [vmem:[%s1] sm:$0xff]
  %v22 = vld [vmem:[%s1 + $0x8] sm:$0xff]
  %v23 = vld [vmem:[%s2] sm:$0xff]
  %v24 = vld [vmem:[%s2 + $0x8] sm:$0xff]
  %v25 = vld [vmem:[%s3] sm:$0xff]
  %v26 = vld [vmem:[%s3 + $0x8] sm:$0xff]
  %v27 = vld [vmem:[%s4] sm:$0x3]
  %29 = vset.pattern.permute.xlu0 0
  %30 = vperm.xlu0 %29, %v21
  %v31 = vpop.permute.xlu0 %30
  %34 = vset.pattern.permute.xlu0 0
  %35 = vperm.xlu0 %34, %v22
  %v36 = vpop.permute.xlu0 %35
  %v38 = vlaneseq
  %v39 = vshrl.u32 %v38, 7
  %v40 = vsub.s32 0, %v39
  %v41 = vrot.slane %v20, %v40
  %v42 = vmul.f32 %v31, %v41
  %v43 = vmul.f32 %v36, %v41
  %44 = vset.pattern.permute.xlu0 1
  %45 = vperm.xlu0 %44, %v21
  %v46 = vpop.permute.xlu0 %45
  %48 = vset.pattern.permute.xlu0 1
  %49 = vperm.xlu0 %48, %v22
  %v50 = vpop.permute.xlu0 %49
  %v52 = vlaneseq
  %v53 = vshrl.u32 %v52, 7
  %v54 = vsub.s32 1, %v53
  %v55 = vrot.slane %v20, %v54
  %v56 = vmul.f32 %v46, %v55
  %v57 = vmul.f32 %v50, %v55
  %v58 = vadd.f32 %v42, %v56
  %v59 = vadd.f32 %v43, %v57
  %60 = vset.pattern.permute.xlu0 2
  %61 = vperm.xlu0 %60, %v21
  %v62 = vpop.permute.xlu0 %61
  %64 = vset.pattern.permute.xlu0 2
  %65 = vperm.xlu0 %64, %v22
  %v66 = vpop.permute.xlu0 %65
  %v68 = vlaneseq
  %v69 = vshrl.u32 %v68, 7
  %v70 = vsub.s32 2, %v69
  %v71 = vrot.slane %v20, %v70
  %v72 = vmul.f32 %v62, %v71
  %v73 = vmul.f32 %v66, %v71
  %v74 = vadd.f32 %v58, %v72
  %v75 = vadd.f32 %v59, %v73
  %77 = vset.pattern.permute.xlu0 0
  %78 = vperm.xlu0 %77, %v23
  %v79 = vpop.permute.xlu0 %78
  %82 = vset.pattern.permute.xlu0 0
  %83 = vperm.xlu0 %82, %v24
  %v84 = vpop.permute.xlu0 %83
  %v86 = vadd.f32 %v74, %v79
  %v87 = vadd.f32 %v75, %v84
  %v88 = vmax.f32 %v86, 0.0
  %v89 = vmax.f32 %v87, 0.0
  %91 = vset.pattern.permute.xlu0 0
  %92 = vperm.xlu0 %91, %v25
  %v93 = vpop.permute.xlu0 %92
  %96 = vset.pattern.permute.xlu0 0
  %97 = vperm.xlu0 %96, %v26
  %v98 = vpop.permute.xlu0 %97
  %v100 = vmul.f32 %v93, %v88
  %v101 = vmul.f32 %v98, %v89
  %v102 = vadd.f32 %v100, %v101
  %v103 = vrot.slane %v102, 4
  %v104 = vadd.f32 %v102, %v103
  %v105 = vrot.slane %v104, 2
  %v106 = vadd.f32 %v104, %v105
  %v107 = vrot.slane %v106, 1
  %v108 = vadd.f32 %v106, %v107
  %109 = vset.pattern.permute.xlu0 1
  %110 = vperm.xlu0 %109, %v25
  %v111 = vpop.permute.xlu0 %110
  %113 = vset.pattern.permute.xlu0 1
  %114 = vperm.xlu0 %113, %v26
  %v115 = vpop.permute.xlu0 %114
  %v117 = vmul.f32 %v111, %v88
  %v118 = vmul.f32 %v115, %v89
  %v119 = vadd.f32 %v117, %v118
  %v120 = vrot.slane %v119, 4
  %v121 = vadd.f32 %v119, %v120
  %v122 = vrot.slane %v121, 2
  %v123 = vadd.f32 %v121, %v122
  %v124 = vrot.slane %v123, 1
  %v125 = vadd.f32 %v123, %v124
  %127 = vset.pattern.permute.xlu0 0
  %128 = vperm.xlu0 %127, %v27
  %v129 = vpop.permute.xlu0 %128
  %v131 = vadd.f32 %v108, %v129
  %132 = vst [vmem:[%s5] sm:$0x1] %v131
  %v133 = vadd.f32 %v125, %v129
  %134 = vst [vmem:[%s5] sm:$0x2] %v133
  // Predicated region
  $region22: #{mlp_forward.1} parent=0 // pred_check
    _
  $region23: #{mlp_forward.1} parent=0 // pred_check_branch
    %136 = sbr.rel (0) target = $region25
  $region24: #{mlp_forward.1} parent=0 // pred_region
    _
  $region25: #{mlp_forward.1} parent=0 // pred_fallthru
    _
  // Predicated region
  $region26: #{mlp_forward.1} parent=0 // pred_check
    _
  $region27: #{mlp_forward.1} parent=0 // pred_check_branch
    %138 = sbr.rel (0) target = $region29
  $region28: #{mlp_forward.1} parent=0 // pred_region
    _
  $region29: #{mlp_forward.1} parent=0 // pred_fallthru
    _

</llo_original>
